<compile_context>
chip_gen: v7x
topology: tpu7x:2x2x1
jax: 0.10.0
libtpu: 0.0.40
codegen_flags: <defaults>
</compile_context>

<pallas_src>
import functools

import jax
import jax.numpy as jnp
from jax.experimental import pallas as pl
from jax.experimental.pallas import tpu as pltpu


def _round_up(n, m):
    return ((n + m - 1) // m) * m


def _pad2(a, rows, cols):
    return jnp.pad(a, ((0, rows - a.shape[0]), (0, cols - a.shape[1])))


def _maybe_pad_cast(a, rows, cols, dtype):
    """Pad/cast only when necessary (avoids a pointless HBM round trip)."""
    if a.shape == (rows, cols) and a.dtype == dtype:
        return a
    return _pad2(a.astype(dtype), rows, cols)


# ----------------------------------------------------------------------------
# Kernel
# ----------------------------------------------------------------------------
def _cvae_kernel(x_ref, c_ref, eps_ref,
                 w1x_ref, wc_ref, b1_ref,
                 w2_ref, b2_ref,
                 w3z_ref, b3_ref,
                 w4_ref, b4_ref,
                 out_ref, mulv_ref,
                 *, lp, hp, compute_dtype):
    f32 = jnp.float32
    x = x_ref[...]
    c = c_ref[...]

    # Fused class-conditioning matmul: one pass over c / one weight load feeds
    # both fc1 (cols [0:hp)) and fc3 (cols [hp:2hp)).  hp is a multiple of 128
    # so the slices never cross a (8,128) tile boundary.
    hc = jnp.dot(c, wc_ref[...], preferred_element_type=f32)

    # ---- encode: h1 = relu(fc1(cat[x, c])) == relu(x@W1x + c@W1c + b1) ----
    h1 = (jnp.dot(x, w1x_ref[...], preferred_element_type=f32)
          + hc[:, :hp] + b1_ref[...])
    h1 = jnp.maximum(h1, 0.0).astype(compute_dtype)

    # fused fc21/fc22 head: one lane-dense (TB, 2*Lp) matmul -> mu || logvar
    mulv = jnp.dot(h1, w2_ref[...], preferred_element_type=f32) + b2_ref[...]
    mu = mulv[:, :lp]
    logvar = mulv[:, lp:]

    # ---- reparametrize (training mode); elementwise math stays f32 ----
    # NOTE: padded logvar lanes have weight=0, bias=0 -> std=1, z=eps there.
    # This is harmless ONLY because W3z's padded rows are zero (invariant
    # enforced in prepare_kernel_params).
    std = jnp.exp(0.5 * logvar)
    z = (eps_ref[...] * std + mu).astype(compute_dtype)

    # ---- decode: h3 = relu(fc3(cat[z, c])) == relu(z@W3z + c@W3c + b3) ----
    h3 = (jnp.dot(z, w3z_ref[...], preferred_element_type=f32)
          + hc[:, hp:] + b3_ref[...])
    h3 = jnp.maximum(h3, 0.0).astype(compute_dtype)

    out = jnp.dot(h3, w4_ref[...], preferred_element_type=f32) + b4_ref[...]

    out_ref[...] = out.astype(out_ref.dtype)   # bf16 in the default path
    mulv_ref[...] = mulv                       # f32 lane-dense mu||logvar slab


# ----------------------------------------------------------------------------
# Parameters
# ----------------------------------------------------------------------------
def init_cvae_params(key, feature_size, latent_size, class_size, hidden_size=400):
    """Deterministic PyTorch-Linear-style init. Weights stored as (in, out)."""
    def linear(k, fan_in, fan_out):
        kw, kb = jax.random.split(k)
        bound = 1.0 / jnp.sqrt(fan_in)
        w = jax.random.uniform(kw, (fan_in, fan_out), jnp.float32, -bound, bound)
        b = jax.random.uniform(kb, (1, fan_out), jnp.float32, -bound, bound)
        return w, b

    k1, k2, k3, k4, k5 = jax.random.split(key, 5)
    w1, b1 = linear(k1, feature_size + class_size, hidden_size)
    w21, b21 = linear(k2, hidden_size, latent_size)
    w22, b22 = linear(k3, hidden_size, latent_size)
    w3, b3 = linear(k4, latent_size + class_size, hidden_size)
    w4, b4 = linear(k5, hidden_size, feature_size)
    return dict(w1=w1, b1=b1, w21=w21, b21=b21, w22=w22, b22=b22,
                w3=w3, b3=b3, w4=w4, b4=b4)


def prepare_kernel_params(raw, feature_size, latent_size, class_size,
                          hidden_size, compute_dtype=jnp.bfloat16):
    """Pad every dim to a multiple of 128, split the concat weights, fuse the
    fc21/fc22 head, and fuse the two class-conditioning weights into one
    (Cp, 2*Hp) block.  Weights are cast to compute_dtype (bf16 default, f32
    optional); biases stay f32 (added post-accumulation)."""
    F, C, L, H = feature_size, class_size, latent_size, hidden_size
    Fp, Cp, Lp, Hp = (_round_up(d, 128) for d in (F, C, L, H))

    w1 = raw["w1"]                      # (F+C, H)
    w1x = _pad2(w1[:F], Fp, Hp)
    b1 = _pad2(raw["b1"], 1, Hp)

    w3 = raw["w3"]                      # (L+C, H)
    w3z = _pad2(w3[:L], Lp, Hp)         # padded rows MUST stay zero (see kernel)
    b3 = _pad2(raw["b3"], 1, Hp)

    # Fused class-conditioning weight: cols [0:Hp) = fc1's c-part,
    # cols [Hp:2Hp) = fc3's c-part.
    wc = jnp.zeros((Cp, 2 * Hp), jnp.float32)
    wc = wc.at[:C, :H].set(w1[F:]).at[:C, Hp:Hp + H].set(w3[L:])

    # Fused latent head: cols [0:Lp) = mu (fc21), [Lp:2Lp) = logvar (fc22).
    w2 = jnp.zeros((Hp, 2 * Lp), jnp.float32)
    w2 = w2.at[:H, :L].set(raw["w21"]).at[:H, Lp:Lp + L].set(raw["w22"])
    b2 = jnp.zeros((1, 2 * Lp), jnp.float32)
    b2 = b2.at[:, :L].set(raw["b21"][0]).at[:, Lp:Lp + L].set(raw["b22"][0])

    w4 = _pad2(raw["w4"], Hp, Fp)
    b4 = _pad2(raw["b4"], 1, Fp)

    cdt = compute_dtype
    return dict(w1x=w1x.astype(cdt), wc=wc.astype(cdt), b1=b1,
                w2=w2.astype(cdt), b2=b2,
                w3z=w3z.astype(cdt), b3=b3,
                w4=w4.astype(cdt), b4=b4)


# ----------------------------------------------------------------------------
# Wrapper
# ----------------------------------------------------------------------------
def _default_vmem_limit_bytes():
    """~3/4 of physical VMEM: 96 MiB on v5e/v6e, 48 MiB on v7x."""
    cap = None
    try:
        cap = getattr(pltpu.get_tpu_info(), "vmem_capacity_bytes", None)
    except Exception:
        cap = None
    if not cap:
        cap = 64 * 1024 * 1024          # conservative fallback (v7x physical)
    return int(min(cap * 3 // 4, 100 * 1024 * 1024))


def _resident_spec(a):
    """Whole-array, constant-index block: fetched once, VMEM-resident.
    Single-buffered (it is never re-fetched, so double-buffering only wastes
    VMEM)."""
    idx = lambda i: (0, 0)
    try:
        return pl.BlockSpec(a.shape, idx, pipeline_mode=pl.Buffered(1))
    except TypeError:   # older BlockSpec signature without pipeline_mode
        return pl.BlockSpec(a.shape, idx)


@functools.partial(jax.jit, static_argnames=("batch_tile",))
def cvae_forward(x, c, eps, kparams, batch_tile=None):
    """x: (B, F), c: (B, C), eps: (B, L).
    Returns (recon, mu, logvar); recon in the compute dtype, mu/logvar f32."""
    B, F = x.shape
    C = c.shape[1]
    L = eps.shape[1]
    Fp, Hp = kparams["w1x"].shape
    Cp = kparams["wc"].shape[0]
    Lp = kparams["w3z"].shape[0]
    cdt = kparams["w1x"].dtype

    # Batch tile: big enough to amortize the ~0.35us/step pipeline overhead,
    # small enough to (a) fit the per-generation VMEM budget with
    # single-buffered weights and (b) give >=4 grid steps on larger batches so
    # v7x's two TensorCores both get work via the "parallel" grid axis.
    if batch_tile is not None:
        TB = batch_tile
    else:
        TB = min(_round_up(max(pl.cdiv(B, 4), 1), 8), 512)
    Bp = _round_up(B, TB)

    xp = _maybe_pad_cast(x, Bp, Fp, cdt)
    cp = _maybe_pad_cast(c, Bp, Cp, cdt)
    ep = _maybe_pad_cast(eps, Bp, Lp, jnp.float32)   # reparam math stays f32

    grid = (Bp // TB,)

    def act_spec(d):
        return pl.BlockSpec((TB, d), lambda i: (i, 0))

    in_specs = [
        act_spec(Fp), act_spec(Cp), act_spec(Lp),
        _resident_spec(kparams["w1x"]), _resident_spec(kparams["wc"]),
        _resident_spec(kparams["b1"]),
        _resident_spec(kparams["w2"]), _resident_spec(kparams["b2"]),
        _resident_spec(kparams["w3z"]), _resident_spec(kparams["b3"]),
        _resident_spec(kparams["w4"]), _resident_spec(kparams["b4"]),
    ]
    out_specs = (act_spec(Fp), act_spec(2 * Lp))
    out_shape = (
        jax.ShapeDtypeStruct((Bp, Fp), cdt),               # recon (padded)
        jax.ShapeDtypeStruct((Bp, 2 * Lp), jnp.float32),   # mu||logvar slab
    )

    # Advisory cost hint for XLA's scheduler around the custom call.
    flops = 2 * Bp * (Fp * Hp + Cp * 2 * Hp + Hp * 2 * Lp + Lp * Hp + Hp * Fp)
    transc = Bp * Lp
    weight_bytes = sum(int(v.size) * v.dtype.itemsize for v in kparams.values())
    act_bytes = (int(xp.size) * xp.dtype.itemsize
                 + int(cp.size) * cp.dtype.itemsize
                 + int(ep.size) * 4
                 + Bp * Fp * jnp.dtype(cdt).itemsize
                 + Bp * 2 * Lp * 4)
    cost = pl.CostEstimate(flops=int(flops), transcendentals=int(transc),
                           bytes_accessed=int(weight_bytes + act_bytes))

    kernel = functools.partial(_cvae_kernel, lp=Lp, hp=Hp, compute_dtype=cdt)

    compiler_params = pltpu.CompilerParams(
        dimension_semantics=("parallel",),        # shard batch across TCs (v7x)
        vmem_limit_bytes=_default_vmem_limit_bytes(),
        # Let XLA fuse the activation pad/cast into the kernel's input feed
        # instead of a separate HBM round trip (weights stay as-is).
        allow_input_fusion=[True, True, True] + [False] * 9,
    )

    recon_p, mulv_p = pl.pallas_call(
        kernel,
        grid=grid,
        in_specs=in_specs,
        out_specs=out_specs,
        out_shape=out_shape,
        compiler_params=compiler_params,
        cost_estimate=cost,
    )(xp, cp, ep,
      kparams["w1x"], kparams["wc"], kparams["b1"],
      kparams["w2"], kparams["b2"],
      kparams["w3z"], kparams["b3"],
      kparams["w4"], kparams["b4"])

    recon = recon_p[:B, :F]
    mu = mulv_p[:B, :L]
    logvar = mulv_p[:B, Lp:Lp + L]
    return recon, mu, logvar


# ----------------------------------------------------------------------------
# Pure-JAX reference (mirrors the PyTorch module, training mode)
# ----------------------------------------------------------------------------
def _reference_forward(x, c, eps, raw):
    hi = jax.lax.Precision.HIGHEST
    mm = lambda a, b: jnp.dot(a, b, precision=hi)
    xc = jnp.concatenate([x, c], axis=1)
    h1 = jnp.maximum(mm(xc, raw["w1"]) + raw["b1"], 0.0)
    mu = mm(h1, raw["w21"]) + raw["b21"]
    logvar = mm(h1, raw["w22"]) + raw["b22"]
    z = eps * jnp.exp(0.5 * logvar) + mu
    zc = jnp.concatenate([z, c], axis=1)
    h3 = jnp.maximum(mm(zc, raw["w3"]) + raw["b3"], 0.0)
    out = mm(h3, raw["w4"]) + raw["b4"]
    return out, mu, logvar


if __name__ == "__main__":
    # Small, forward-consistent shapes.
    batch = 8
    feature_size = 32
    class_size = 8
    latent_size = 16
    hidden_size = 64

    key = jax.random.PRNGKey(0)
    kx, kc, keps, kp = jax.random.split(key, 4)

    x = jax.random.normal(kx, (batch, feature_size), jnp.float32)
    c = jax.nn.one_hot(
        jax.random.randint(kc, (batch,), 0, class_size), class_size
    ).astype(jnp.float32)
    eps = jax.random.normal(keps, (batch, latent_size), jnp.float32)

    raw = init_cvae_params(kp, feature_size, latent_size, class_size, hidden_size)
    r_ref, mu_ref, lv_ref = _reference_forward(x, c, eps, raw)

    # --- f32 compute path: must match the reference tightly ---
    kp_f32 = prepare_kernel_params(raw, feature_size, latent_size, class_size,
                                   hidden_size, jnp.float32)
    recon, mu, logvar = cvae_forward(x, c, eps, kp_f32)
    jax.block_until_ready((recon, mu, logvar))

    assert recon.shape == (batch, feature_size)
    assert mu.shape == (batch, latent_size) and logvar.shape == (batch, latent_size)
    assert jnp.allclose(recon, r_ref, atol=2e-4, rtol=2e-4)
    assert jnp.allclose(mu, mu_ref, atol=2e-4, rtol=2e-4)
    assert jnp.allclose(logvar, lv_ref, atol=2e-4, rtol=2e-4)

    # --- default bf16 perf path (bf16 operands, f32 accumulation) ---
    kp_bf16 = prepare_kernel_params(raw, feature_size, latent_size, class_size,
                                    hidden_size)          # default = bf16
    r16, mu16, lv16 = cvae_forward(x, c, eps, kp_bf16)
    jax.block_until_ready((r16, mu16, lv16))
    assert bool(jnp.all(jnp.isfinite(r16.astype(jnp.float32))))
    assert jnp.allclose(r16.astype(jnp.float32), r_ref, atol=0.25, rtol=0.1)
    assert jnp.allclose(mu16, mu_ref, atol=0.25, rtol=0.1)

    # TODO(synk): use_batch_norm=True path (BatchNorm1d after fc1/fc3) is not
    # implemented; the module default (False) is what this kernel covers.
    print("KERNEL_OK")
</pallas_src>

<mosaic_0001>
module attributes {stable_mosaic.version = 11 : i64} {
  func.func @_cvae_kernel(%arg0: i32, %arg1: memref<8x128xf32, #tpu.memory_space<vmem>>, %arg2: memref<8x128xf32, #tpu.memory_space<vmem>>, %arg3: memref<8x128xf32, #tpu.memory_space<vmem>>, %arg4: memref<128x128xf32, #tpu.memory_space<vmem>>, %arg5: memref<128x256xf32, #tpu.memory_space<vmem>>, %arg6: memref<1x128xf32, #tpu.memory_space<vmem>>, %arg7: memref<128x256xf32, #tpu.memory_space<vmem>>, %arg8: memref<1x256xf32, #tpu.memory_space<vmem>>, %arg9: memref<128x128xf32, #tpu.memory_space<vmem>>, %arg10: memref<1x128xf32, #tpu.memory_space<vmem>>, %arg11: memref<128x128xf32, #tpu.memory_space<vmem>>, %arg12: memref<1x128xf32, #tpu.memory_space<vmem>>, %arg13: memref<8x128xf32, #tpu.memory_space<vmem>>, %arg14: memref<8x256xf32, #tpu.memory_space<vmem>>) attributes {dimension_semantics = [#tpu.dimension_semantics<parallel>], iteration_bounds = array<i64: 1>, scalar_prefetch = 0 : i64, scratch_operands = 0 : i64, tpu.core_type = #tpu.core_type<tc>, window_params = [{transform_indices = @transform_0, window_bounds = array<i64: 8, 128>}, {transform_indices = @transform_1, window_bounds = array<i64: 8, 128>}, {transform_indices = @transform_2, window_bounds = array<i64: 8, 128>}, {pipeline_mode = #tpu.pipeline_mode<synchronous>, transform_indices = @transform_3, window_bounds = array<i64: 128, 128>}, {pipeline_mode = #tpu.pipeline_mode<synchronous>, transform_indices = @transform_4, window_bounds = array<i64: 128, 256>}, {pipeline_mode = #tpu.pipeline_mode<synchronous>, transform_indices = @transform_5, window_bounds = array<i64: 1, 128>}, {pipeline_mode = #tpu.pipeline_mode<synchronous>, transform_indices = @transform_6, window_bounds = array<i64: 128, 256>}, {pipeline_mode = #tpu.pipeline_mode<synchronous>, transform_indices = @transform_7, window_bounds = array<i64: 1, 256>}, {pipeline_mode = #tpu.pipeline_mode<synchronous>, transform_indices = @transform_8, window_bounds = array<i64: 128, 128>}, {pipeline_mode = #tpu.pipeline_mode<synchronous>, transform_indices = @transform_9, window_bounds = array<i64: 1, 128>}, {pipeline_mode = #tpu.pipeline_mode<synchronous>, transform_indices = @transform_10, window_bounds = array<i64: 128, 128>}, {pipeline_mode = #tpu.pipeline_mode<synchronous>, transform_indices = @transform_11, window_bounds = array<i64: 1, 128>}, {transform_indices = @transform_12, window_bounds = array<i64: 8, 128>}, {transform_indices = @transform_13, window_bounds = array<i64: 8, 256>}]} {
    %c0 = arith.constant 0 : index
    %c0_0 = arith.constant 0 : index
    %0 = vector.load %arg1[%c0, %c0_0] : memref<8x128xf32, #tpu.memory_space<vmem>>, vector<8x128xf32>
    %c0_1 = arith.constant 0 : index
    %c0_2 = arith.constant 0 : index
    %1 = vector.load %arg2[%c0_1, %c0_2] : memref<8x128xf32, #tpu.memory_space<vmem>>, vector<8x128xf32>
    %c0_3 = arith.constant 0 : index
    %c0_4 = arith.constant 0 : index
    %2 = vector.load %arg5[%c0_3, %c0_4] : memref<128x256xf32, #tpu.memory_space<vmem>>, vector<128x256xf32>
    %cst = arith.constant dense<0.000000e+00> : vector<8x256xf32>
    %3 = tpu.matmul %1, %2, %cst {dimension_numbers = #tpu.dot_dimension_numbers<[1], [0], [0], [1], [0, 0, 1, 1], [], []>} : vector<8x128xf32>, vector<128x256xf32>, vector<8x256xf32> -> vector<8x256xf32>
    %c0_5 = arith.constant 0 : index
    %c0_6 = arith.constant 0 : index
    %4 = vector.load %arg4[%c0_5, %c0_6] : memref<128x128xf32, #tpu.memory_space<vmem>>, vector<128x128xf32>
    %cst_7 = arith.constant dense<0.000000e+00> : vector<8x128xf32>
    %5 = tpu.matmul %0, %4, %cst_7 {dimension_numbers = #tpu.dot_dimension_numbers<[1], [0], [0], [1], [0, 0, 1, 1], [], []>} : vector<8x128xf32>, vector<128x128xf32>, vector<8x128xf32> -> vector<8x128xf32>
    %6 = vector.extract_strided_slice %3 {offsets = [0, 0], sizes = [8, 128], strides = [1, 1]} : vector<8x256xf32> to vector<8x128xf32>
    %7 = arith.addf %5, %6 : vector<8x128xf32>
    %c0_8 = arith.constant 0 : index
    %c0_9 = arith.constant 0 : index
    %8 = vector.load %arg6[%c0_8, %c0_9] : memref<1x128xf32, #tpu.memory_space<vmem>>, vector<1x128xf32>
    %9 = vector.broadcast %8 : vector<1x128xf32> to vector<8x128xf32>
    %10 = arith.addf %7, %9 : vector<8x128xf32>
    %cst_10 = arith.constant 0.000000e+00 : f32
    %11 = vector.broadcast %cst_10 : f32 to vector<8x128xf32>
    %12 = arith.maximumf %10, %11 : vector<8x128xf32>
    %c0_11 = arith.constant 0 : index
    %c0_12 = arith.constant 0 : index
    %13 = vector.load %arg7[%c0_11, %c0_12] : memref<128x256xf32, #tpu.memory_space<vmem>>, vector<128x256xf32>
    %cst_13 = arith.constant dense<0.000000e+00> : vector<8x256xf32>
    %14 = tpu.matmul %12, %13, %cst_13 {dimension_numbers = #tpu.dot_dimension_numbers<[1], [0], [0], [1], [0, 0, 1, 1], [], []>} : vector<8x128xf32>, vector<128x256xf32>, vector<8x256xf32> -> vector<8x256xf32>
    %c0_14 = arith.constant 0 : index
    %c0_15 = arith.constant 0 : index
    %15 = vector.load %arg8[%c0_14, %c0_15] : memref<1x256xf32, #tpu.memory_space<vmem>>, vector<1x256xf32>
    %16 = vector.broadcast %15 : vector<1x256xf32> to vector<8x256xf32>
    %17 = arith.addf %14, %16 : vector<8x256xf32>
    %18 = vector.extract_strided_slice %17 {offsets = [0, 0], sizes = [8, 128], strides = [1, 1]} : vector<8x256xf32> to vector<8x128xf32>
    %19 = vector.extract_strided_slice %17 {offsets = [0, 128], sizes = [8, 128], strides = [1, 1]} : vector<8x256xf32> to vector<8x128xf32>
    %cst_16 = arith.constant 5.000000e-01 : f32
    %20 = vector.broadcast %cst_16 : f32 to vector<8x128xf32>
    %21 = arith.mulf %20, %19 : vector<8x128xf32>
    %22 = math.exp %21 : vector<8x128xf32>
    %c0_17 = arith.constant 0 : index
    %c0_18 = arith.constant 0 : index
    %23 = vector.load %arg3[%c0_17, %c0_18] : memref<8x128xf32, #tpu.memory_space<vmem>>, vector<8x128xf32>
    %24 = arith.mulf %23, %22 : vector<8x128xf32>
    %25 = arith.addf %24, %18 : vector<8x128xf32>
    %c0_19 = arith.constant 0 : index
    %c0_20 = arith.constant 0 : index
    %26 = vector.load %arg9[%c0_19, %c0_20] : memref<128x128xf32, #tpu.memory_space<vmem>>, vector<128x128xf32>
    %cst_21 = arith.constant dense<0.000000e+00> : vector<8x128xf32>
    %27 = tpu.matmul %25, %26, %cst_21 {dimension_numbers = #tpu.dot_dimension_numbers<[1], [0], [0], [1], [0, 0, 1, 1], [], []>} : vector<8x128xf32>, vector<128x128xf32>, vector<8x128xf32> -> vector<8x128xf32>
    %28 = vector.extract_strided_slice %3 {offsets = [0, 128], sizes = [8, 128], strides = [1, 1]} : vector<8x256xf32> to vector<8x128xf32>
    %29 = arith.addf %27, %28 : vector<8x128xf32>
    %c0_22 = arith.constant 0 : index
    %c0_23 = arith.constant 0 : index
    %30 = vector.load %arg10[%c0_22, %c0_23] : memref<1x128xf32, #tpu.memory_space<vmem>>, vector<1x128xf32>
    %31 = vector.broadcast %30 : vector<1x128xf32> to vector<8x128xf32>
    %32 = arith.addf %29, %31 : vector<8x128xf32>
    %cst_24 = arith.constant 0.000000e+00 : f32
    %33 = vector.broadcast %cst_24 : f32 to vector<8x128xf32>
    %34 = arith.maximumf %32, %33 : vector<8x128xf32>
    %c0_25 = arith.constant 0 : index
    %c0_26 = arith.constant 0 : index
    %35 = vector.load %arg11[%c0_25, %c0_26] : memref<128x128xf32, #tpu.memory_space<vmem>>, vector<128x128xf32>
    %cst_27 = arith.constant dense<0.000000e+00> : vector<8x128xf32>
    %36 = tpu.matmul %34, %35, %cst_27 {dimension_numbers = #tpu.dot_dimension_numbers<[1], [0], [0], [1], [0, 0, 1, 1], [], []>} : vector<8x128xf32>, vector<128x128xf32>, vector<8x128xf32> -> vector<8x128xf32>
    %c0_28 = arith.constant 0 : index
    %c0_29 = arith.constant 0 : index
    %37 = vector.load %arg12[%c0_28, %c0_29] : memref<1x128xf32, #tpu.memory_space<vmem>>, vector<1x128xf32>
    %38 = vector.broadcast %37 : vector<1x128xf32> to vector<8x128xf32>
    %39 = arith.addf %36, %38 : vector<8x128xf32>
    %c0_30 = arith.constant 0 : index
    %c0_31 = arith.constant 0 : index
    %40 = vector.load %arg13[%c0_30, %c0_31] : memref<8x128xf32, #tpu.memory_space<vmem>>, vector<8x128xf32>
    tpu.vector_store %arg13[%c0_30, %c0_31], %39 {strides = array<i32>} : memref<8x128xf32, #tpu.memory_space<vmem>>, vector<8x128xf32>,
    %c0_32 = arith.constant 0 : index
    %c0_33 = arith.constant 0 : index
    %41 = vector.load %arg14[%c0_32, %c0_33] : memref<8x256xf32, #tpu.memory_space<vmem>>, vector<8x256xf32>
    tpu.vector_store %arg14[%c0_32, %c0_33], %17 {strides = array<i32>} : memref<8x256xf32, #tpu.memory_space<vmem>>, vector<8x256xf32>,
    return
  }
  func.func @transform_0(%arg0: i32) -> (i32, i32) {
    %c0_i32 = arith.constant 0 : i32
    %c0_i32_0 = arith.constant 0 : i32
    return %arg0, %c0_i32 : i32, i32
  }
  func.func @transform_1(%arg0: i32) -> (i32, i32) {
    %c0_i32 = arith.constant 0 : i32
    %c0_i32_0 = arith.constant 0 : i32
    return %arg0, %c0_i32 : i32, i32
  }
  func.func @transform_2(%arg0: i32) -> (i32, i32) {
    %c0_i32 = arith.constant 0 : i32
    %c0_i32_0 = arith.constant 0 : i32
    return %arg0, %c0_i32 : i32, i32
  }
  func.func @transform_3(%arg0: i32) -> (i32, i32) {
    %c0_i32 = arith.constant 0 : i32
    %c0_i32_0 = arith.constant 0 : i32
    %c0_i32_1 = arith.constant 0 : i32
    return %c0_i32, %c0_i32_0 : i32, i32
  }
  func.func @transform_4(%arg0: i32) -> (i32, i32) {
    %c0_i32 = arith.constant 0 : i32
    %c0_i32_0 = arith.constant 0 : i32
    %c0_i32_1 = arith.constant 0 : i32
    return %c0_i32, %c0_i32_0 : i32, i32
  }
  func.func @transform_5(%arg0: i32) -> (i32, i32) {
    %c0_i32 = arith.constant 0 : i32
    %c0_i32_0 = arith.constant 0 : i32
    %c0_i32_1 = arith.constant 0 : i32
    return %c0_i32, %c0_i32_0 : i32, i32
  }
  func.func @transform_6(%arg0: i32) -> (i32, i32) {
    %c0_i32 = arith.constant 0 : i32
    %c0_i32_0 = arith.constant 0 : i32
    %c0_i32_1 = arith.constant 0 : i32
    return %c0_i32, %c0_i32_0 : i32, i32
  }
  func.func @transform_7(%arg0: i32) -> (i32, i32) {
    %c0_i32 = arith.constant 0 : i32
    %c0_i32_0 = arith.constant 0 : i32
    %c0_i32_1 = arith.constant 0 : i32
    return %c0_i32, %c0_i32_0 : i32, i32
  }
  func.func @transform_8(%arg0: i32) -> (i32, i32) {
    %c0_i32 = arith.constant 0 : i32
    %c0_i32_0 = arith.constant 0 : i32
    %c0_i32_1 = arith.constant 0 : i32
    return %c0_i32, %c0_i32_0 : i32, i32
  }
  func.func @transform_9(%arg0: i32) -> (i32, i32) {
    %c0_i32 = arith.constant 0 : i32
    %c0_i32_0 = arith.constant 0 : i32
    %c0_i32_1 = arith.constant 0 : i32
    return %c0_i32, %c0_i32_0 : i32, i32
  }
  func.func @transform_10(%arg0: i32) -> (i32, i32) {
    %c0_i32 = arith.constant 0 : i32
    %c0_i32_0 = arith.constant 0 : i32
    %c0_i32_1 = arith.constant 0 : i32
    return %c0_i32, %c0_i32_0 : i32, i32
  }
  func.func @transform_11(%arg0: i32) -> (i32, i32) {
    %c0_i32 = arith.constant 0 : i32
    %c0_i32_0 = arith.constant 0 : i32
    %c0_i32_1 = arith.constant 0 : i32
    return %c0_i32, %c0_i32_0 : i32, i32
  }
  func.func @transform_12(%arg0: i32) -> (i32, i32) {
    %c0_i32 = arith.constant 0 : i32
    %c0_i32_0 = arith.constant 0 : i32
    return %arg0, %c0_i32 : i32, i32
  }
  func.func @transform_13(%arg0: i32) -> (i32, i32) {
    %c0_i32 = arith.constant 0 : i32
    %c0_i32_0 = arith.constant 0 : i32
    return %arg0, %c0_i32 : i32, i32
  }
}

</mosaic_0001>

<llo_original>
// kernel: cvae_forward.2
$region0: #{cvae_forward.2}
  #allocation0 [shape = 'u32[]', space=smem, size = 0x4, offset = 0x4, fixed_abs, tag = 'smem constant byte address 0x4 - core index']
  #allocation1 [shape = 'u32[144,128]{1,0:T(1,128)}', space=vmem, size = 0x12000, scoped, tag = 'internal scratch']
  #allocation2 [shape = 'u32[2048]{0}', space=vmem, size = 0x2000, scoped, tag = 'scoped memory for cvae_forward.2']
  #allocation3 [shape = 'u32[2048]{0}', space=vmem, size = 0x2000, scoped, tag = 'scoped memory for cvae_forward.2']
  #allocation4 [shape = 'u32[2048]{0}', space=vmem, size = 0x2000, scoped, tag = 'scoped memory for cvae_forward.2']
  #allocation5 [shape = 'u32[2048]{0}', space=vmem, size = 0x2000, scoped, tag = 'scoped memory for cvae_forward.2']
  #allocation6 [shape = 'u32[2048]{0}', space=vmem, size = 0x2000, scoped, tag = 'scoped memory for cvae_forward.2']
  #allocation7 [shape = 'u32[2048]{0}', space=vmem, size = 0x2000, scoped, tag = 'scoped memory for cvae_forward.2']
  #allocation8 [shape = 'u32[2048]{0}', space=vmem, size = 0x2000, scoped, tag = 'scoped memory for cvae_forward.2']
  #allocation9 [shape = 'u32[2048]{0}', space=vmem, size = 0x2000, scoped, tag = 'scoped memory for cvae_forward.2']
  #allocation10 [shape = 'u32[2048]{0}', space=vmem, size = 0x2000, scoped, tag = 'scoped memory for cvae_forward.2']
  #allocation11 [shape = 'u32[2048]{0}', space=vmem, size = 0x2000, scoped, tag = 'scoped memory for cvae_forward.2']
  #allocation12 [shape = 'u32[2048]{0}', space=vmem, size = 0x2000, scoped, tag = 'scoped memory for cvae_forward.2']
  #allocation13 [shape = 'u32[2048]{0}', space=vmem, size = 0x2000, scoped, tag = 'scoped memory for cvae_forward.2']
  #allocation14 [shape = 'u32[2048]{0}', space=vmem, size = 0x2000, scoped, tag = 'scoped memory for cvae_forward.2']
  #allocation15 [shape = 'u32[2048]{0}', space=vmem, size = 0x2000, scoped, tag = 'scoped memory for cvae_forward.2']
  #allocation16 [shape = 'u32[2048]{0}', space=vmem, size = 0x2000, scoped, tag = 'scoped memory for cvae_forward.2']
  %s0 = inlined_call_operand.hbm [shape: f32[128,128], index: 0, kind: input, shape index: {}]
  %s1 = inlined_call_operand.hbm [shape: f32[128,256], index: 1, kind: input, shape index: {}]
  %s2 = inlined_call_operand.vmem [shape: f32[1,128], index: 2, kind: input, shape index: {}]
  %s3 = inlined_call_operand.hbm [shape: f32[128,256], index: 3, kind: input, shape index: {}]
  %s4 = inlined_call_operand.vmem [shape: f32[1,256], index: 4, kind: input, shape index: {}]
  %s5 = inlined_call_operand.hbm [shape: f32[128,128], index: 5, kind: input, shape index: {}]
  %s6 = inlined_call_operand.vmem [shape: f32[1,128], index: 6, kind: input, shape index: {}]
  %s7 = inlined_call_operand.hbm [shape: f32[128,128], index: 7, kind: input, shape index: {}]
  %s8 = inlined_call_operand.vmem [shape: f32[1,128], index: 8, kind: input, shape index: {}]
  %s9 = inlined_call_operand.hbm [shape: f32[8,16], index: 9, kind: input, shape index: {}]
  %s10 = inlined_call_operand.<no memory space> [shape: f32[], index: 10, kind: input, shape index: {}]
  %s11 = inlined_call_operand.hbm [shape: f32[8,8], index: 11, kind: input, shape index: {}]
  %s12 = inlined_call_operand.hbm [shape: f32[8,32], index: 12, kind: input, shape index: {}]
  %s13 = inlined_call_operand.hbm [shape: f32[8,128], index: 13, kind: output, shape index: {0}]
  %s14 = inlined_call_operand.vmem [shape: f32[8,256], index: 14, kind: output, shape index: {1}]
  %15 = xla_tuple %s13, %s14
  %s16 = sld [smem:[#allocation0]]
  $region98: #{cvae_forward.2} parent=0
    _
  %s18 = ssub.s32 1, %s16
  %s19 = scalar_select 0, %s18, %s16
  %v20 = vstv %s10
  %v21 = vstv %s10
  %v22 = vstv %s10
  $region1: #{cvae_forward.2} parent=0
    #allocation17 [shape = 'u8[4096]{0}', space=vmem, size = 0x1000, scoped, tag = 'operand span for operand 12']
    #allocation18 [shape = 's32[1]{0}', space=sflag, size = 0x4, scoped, tag = 'scoped memory for cvae_forward.2']
    #allocation19 [shape = 's32[1]{0}', space=sflag, size = 0x4, scoped, tag = 'scoped memory for cvae_forward.2']
    #allocation20 [shape = 'u8[4096]{0}', space=vmem, size = 0x1000, scoped, tag = 'operand span for operand 11']
    #allocation21 [shape = 's32[1]{0}', space=sflag, size = 0x4, scoped, tag = 'scoped memory for cvae_forward.2']
    #allocation22 [shape = 'u8[4096]{0}', space=vmem, size = 0x1000, scoped, tag = 'operand span for operand 9']
    #allocation23 [shape = 'u8[65536]{0}', space=vmem, size = 0x10000, scoped, tag = 'input window, operand 3, single buffered']
    #allocation24 [shape = 's32[1]{0}', space=sflag, size = 0x4, scoped, tag = 'scoped memory for cvae_forward.2']
    #allocation25 [shape = 'u8[131072]{0}', space=vmem, size = 0x20000, scoped, tag = 'input window, operand 4, single buffered']
    #allocation26 [shape = 'u8[131072]{0}', space=vmem, size = 0x20000, scoped, tag = 'input window, operand 6, single buffered']
    #allocation27 [shape = 's32[1]{0}', space=sflag, size = 0x4, scoped, tag = 'scoped memory for cvae_forward.2']
    #allocation28 [shape = 'u8[65536]{0}', space=vmem, size = 0x10000, scoped, tag = 'input window, operand 8, single buffered']
    #allocation29 [shape = 'u8[65536]{0}', space=vmem, size = 0x10000, scoped, tag = 'input window, operand 10, single buffered']
    #allocation30 [shape = 's32[1]{0}', space=sflag, size = 0x4, scoped, tag = 'scoped memory for cvae_forward.2']
    #allocation31 [shape = 'u8[4096]{0}', space=vmem, size = 0x1000, scoped, tag = 'output window, operand 0, single buffered']
    #allocation32 [shape = 'u8[4096]{0}', space=vmem, size = 0x1000, dematerialized = true, scoped, tag = 'FusionAdapter Buffer %fusion.3 = f32[8,128]{1,0:T(8,128)} fusion(%param_12.2, %param_10.3), kind=kLoop, calls=%fused_computation.3.clone, metadata={op_name="jit(cvae_forward)/jit(_pad)/pad" stack_frame_id=3}']
    #allocation33 [shape = 'u8[4096]{0}', space=vmem, size = 0x1000, dematerialized = true, scoped, tag = 'FusionAdapter Buffer %fusion.2 = f32[8,128]{1,0:T(8,128)} fusion(%param_11.3, %param_10.3), kind=kLoop, calls=%fused_computation.2.clone, metadata={op_name="jit(cvae_forward)/jit(_pad)/pad" stack_frame_id=6}']
    #allocation34 [shape = 'u8[4096]{0}', space=vmem, size = 0x1000, dematerialized = true, scoped, tag = 'FusionAdapter Buffer %fusion.1 = f32[8,128]{1,0:T(8,128)} fusion(%param_9.3, %param_10.3), kind=kLoop, calls=%fused_computation.1.clone, metadata={op_name="jit(cvae_forward)/jit(_pad)/pad" stack_frame_id=9}']
    %23 = vsyncpa [#allocation18], 0
    %24 = vsyncpa [#allocation21], 0
    %25 = vsyncpa [#allocation24], 0
    %26 = vsyncpa [#allocation27], 0
    %27 = vsyncpa [#allocation30], 0
    %28 = vsyncpa [#allocation19], 0
    // Predicated region
    $region2: #{cvae_forward.2} parent=1 // pred_check
      _
    $region3: #{cvae_forward.2} parent=1 // pred_check_branch
      %30 = sbr.rel (0) target = $region5
    $region4: #{cvae_forward.2} parent=1 // pred_region
      %s32 = ssub.s32 128, 128
      %33 = vsyncadd [#allocation18], %s32
      %s35 = sshll.u32 [#allocation17], 4
      %s36 = int_to_ptr.vmem [resolvable:$true] %s35
      %38 = dma.hbm_to_vmem [thread:$0]  %s12, 128, %s36, [#allocation18]
    $region5: #{cvae_forward.2} parent=1 // pred_fallthru
      _
    // Predicated region
    $region6: #{cvae_forward.2} parent=1 // pred_check
      _
    $region7: #{cvae_forward.2} parent=1 // pred_check_branch
      %40 = sbr.rel (0) target = $region9
    $region8: #{cvae_forward.2} parent=1 // pred_region
      %s42 = ssub.s32 128, 128
      %43 = vsyncadd [#allocation21], %s42
      %s45 = sshll.u32 [#allocation20], 4
      %s46 = int_to_ptr.vmem [resolvable:$true] %s45
      %48 = dma.hbm_to_vmem [thread:$0]  %s11, 128, %s46, [#allocation21]
    $region9: #{cvae_forward.2} parent=1 // pred_fallthru
      _
    // Predicated region
    $region10: #{cvae_forward.2} parent=1 // pred_check
      _
    $region11: #{cvae_forward.2} parent=1 // pred_check_branch
      %50 = sbr.rel (0) target = $region13
    $region12: #{cvae_forward.2} parent=1 // pred_region
      %s52 = ssub.s32 128, 128
      %53 = vsyncadd [#allocation21], %s52
      %s55 = sshll.u32 [#allocation22], 4
      %s56 = int_to_ptr.vmem [resolvable:$true] %s55
      %58 = dma.hbm_to_vmem [thread:$0]  %s9, 128, %s56, [#allocation21]
    $region13: #{cvae_forward.2} parent=1 // pred_fallthru
      _
    // Predicated region
    $region14: #{cvae_forward.2} parent=1 // pred_check
      _
    $region15: #{cvae_forward.2} parent=1 // pred_check_branch
      %60 = sbr.rel (0) target = $region17
    $region16: #{cvae_forward.2} parent=1 // pred_region
      %s62 = ssub.s32 2048, 2048
      %63 = vsyncadd [#allocation24], %s62
      %s64 = sshll.u32 [#allocation23], 4
      %s65 = int_to_ptr.vmem [resolvable:$true] %s64
      %70 = dma.hbm_to_vmem [thread:$0]  %s0, 2048, %s65, [#allocation24], 128, 128, 8
    $region17: #{cvae_forward.2} parent=1 // pred_fallthru
      _
    // Predicated region
    $region18: #{cvae_forward.2} parent=1 // pred_check
      _
    $region19: #{cvae_forward.2} parent=1 // pred_check_branch
      %72 = sbr.rel (0) target = $region21
    $region20: #{cvae_forward.2} parent=1 // pred_region
      %s74 = ssub.s32 4096, 4096
      %75 = vsyncadd [#allocation24], %s74
      %s76 = sshll.u32 [#allocation25], 4
      %s77 = int_to_ptr.vmem [resolvable:$true] %s76
      %82 = dma.hbm_to_vmem [thread:$0]  %s1, 4096, %s77, [#allocation24], 256, 256, 16
    $region21: #{cvae_forward.2} parent=1 // pred_fallthru
      _
    // Predicated region
    $region22: #{cvae_forward.2} parent=1 // pred_check
      _
    $region23: #{cvae_forward.2} parent=1 // pred_check_branch
      %84 = sbr.rel (0) target = $region25
    $region24: #{cvae_forward.2} parent=1 // pred_region
      _
    $region25: #{cvae_forward.2} parent=1 // pred_fallthru
      _
    // Predicated region
    $region26: #{cvae_forward.2} parent=1 // pred_check
      _
    $region27: #{cvae_forward.2} parent=1 // pred_check_branch
      %86 = sbr.rel (0) target = $region29
    $region28: #{cvae_forward.2} parent=1 // pred_region
      %s88 = ssub.s32 4096, 4096
      %89 = vsyncadd [#allocation27], %s88
      %s90 = sshll.u32 [#allocation26], 4
      %s91 = int_to_ptr.vmem [resolvable:$true] %s90
      %96 = dma.hbm_to_vmem [thread:$0]  %s3, 4096, %s91, [#allocation27], 256, 256, 16
    $region29: #{cvae_forward.2} parent=1 // pred_fallthru
      _
    // Predicated region
    $region30: #{cvae_forward.2} parent=1 // pred_check
      _
    $region31: #{cvae_forward.2} parent=1 // pred_check_branch
      %98 = sbr.rel (0) target = $region33
    $region32: #{cvae_forward.2} parent=1 // pred_region
      _
    $region33: #{cvae_forward.2} parent=1 // pred_fallthru
      _
    // Predicated region
    $region34: #{cvae_forward.2} parent=1 // pred_check
      _
    $region35: #{cvae_forward.2} parent=1 // pred_check_branch
      %100 = sbr.rel (0) target = $region37
    $region36: #{cvae_forward.2} parent=1 // pred_region
      %s102 = ssub.s32 2048, 2048
      %103 = vsyncadd [#allocation27], %s102
      %s104 = sshll.u32 [#allocation28], 4
      %s105 = int_to_ptr.vmem [resolvable:$true] %s104
      %110 = dma.hbm_to_vmem [thread:$0]  %s5, 2048, %s105, [#allocation27], 128, 128, 8
    $region37: #{cvae_forward.2} parent=1 // pred_fallthru
      _
    // Predicated region
    $region38: #{cvae_forward.2} parent=1 // pred_check
      _
    $region39: #{cvae_forward.2} parent=1 // pred_check_branch
      %112 = sbr.rel (0) target = $region41
    $region40: #{cvae_forward.2} parent=1 // pred_region
      _
    $region41: #{cvae_forward.2} parent=1 // pred_fallthru
      _
    // Predicated region
    $region42: #{cvae_forward.2} parent=1 // pred_check
      _
    $region43: #{cvae_forward.2} parent=1 // pred_check_branch
      %114 = sbr.rel (0) target = $region45
    $region44: #{cvae_forward.2} parent=1 // pred_region
      %s116 = ssub.s32 2048, 2048
      %117 = vsyncadd [#allocation30], %s116
      %s118 = sshll.u32 [#allocation29], 4
      %s119 = int_to_ptr.vmem [resolvable:$true] %s118
      %124 = dma.hbm_to_vmem [thread:$0]  %s7, 2048, %s119, [#allocation30], 128, 128, 8
    $region45: #{cvae_forward.2} parent=1 // pred_fallthru
      _
    // Predicated region
    $region46: #{cvae_forward.2} parent=1 // pred_check
      _
    $region47: #{cvae_forward.2} parent=1 // pred_check_branch
      %126 = sbr.rel (0) target = $region49
    $region48: #{cvae_forward.2} parent=1 // pred_region
      _
    $region49: #{cvae_forward.2} parent=1 // pred_fallthru
      _
    // Predicated region
    $region50: #{cvae_forward.2} parent=1 // pred_check
      _
    $region51: #{cvae_forward.2} parent=1 // pred_check_branch
      %128 = sbr.rel (0) target = $region53
    $region52: #{cvae_forward.2} parent=1 // pred_region
      %129 = dma.done [#allocation18], 128
    $region53: #{cvae_forward.2} parent=1 // pred_fallthru
      _
    // Predicated region
    $region54: #{cvae_forward.2} parent=1 // pred_check
      _
    $region55: #{cvae_forward.2} parent=1 // pred_check_branch
      %131 = sbr.rel (0) target = $region57
    $region56: #{cvae_forward.2} parent=1 // pred_region
      %132 = dma.done [#allocation21], 128
    $region57: #{cvae_forward.2} parent=1 // pred_fallthru
      _
    // Predicated region
    $region58: #{cvae_forward.2} parent=1 // pred_check
      _
    $region59: #{cvae_forward.2} parent=1 // pred_check_branch
      %134 = sbr.rel (0) target = $region61
    $region60: #{cvae_forward.2} parent=1 // pred_region
      %135 = dma.done [#allocation21], 128
    $region61: #{cvae_forward.2} parent=1 // pred_fallthru
      _
    // Predicated region
    $region62: #{cvae_forward.2} parent=1 // pred_check
      _
    $region63: #{cvae_forward.2} parent=1 // pred_check_branch
      %137 = sbr.rel (0) target = $region65
    $region64: #{cvae_forward.2} parent=1 // pred_region
      %138 = dma.done [#allocation24], 2048
    $region65: #{cvae_forward.2} parent=1 // pred_fallthru
      _
    // Predicated region
    $region66: #{cvae_forward.2} parent=1 // pred_check
      _
    $region67: #{cvae_forward.2} parent=1 // pred_check_branch
      %140 = sbr.rel (0) target = $region69
    $region68: #{cvae_forward.2} parent=1 // pred_region
      %141 = dma.done [#allocation24], 4096
    $region69: #{cvae_forward.2} parent=1 // pred_fallthru
      _
    // Predicated region
    $region70: #{cvae_forward.2} parent=1 // pred_check
      _
    $region71: #{cvae_forward.2} parent=1 // pred_check_branch
      %143 = sbr.rel (0) target = $region73
    $region72: #{cvae_forward.2} parent=1 // pred_region
      %144 = dma.done [#allocation27], 4096
    $region73: #{cvae_forward.2} parent=1 // pred_fallthru
      _
    // Predicated region
    $region74: #{cvae_forward.2} parent=1 // pred_check
      _
    $region75: #{cvae_forward.2} parent=1 // pred_check_branch
      %146 = sbr.rel (0) target = $region77
    $region76: #{cvae_forward.2} parent=1 // pred_region
      %147 = dma.done [#allocation27], 2048
    $region77: #{cvae_forward.2} parent=1 // pred_fallthru
      _
    // Predicated region
    $region78: #{cvae_forward.2} parent=1 // pred_check
      _
    $region79: #{cvae_forward.2} parent=1 // pred_check_branch
      %149 = sbr.rel (0) target = $region81
    $region80: #{cvae_forward.2} parent=1 // pred_region
      %150 = dma.done [#allocation30], 2048
    $region81: #{cvae_forward.2} parent=1 // pred_fallthru
      _
    %v151 = vld [vmem:[#allocation17] sm:$0xff]
    %v152 = vlaneseq
    %v153 = vand.u32 %v152, 127
    %vm155 = vcmp.lt.s32.totalorder %v153, 32
    %v156 = vsel %vm155, %v151, %v20
    %158 = vst [vmem:[#allocation32] sm:$0xff] %v156
    %v159 = vld [vmem:[#allocation20] sm:$0xff]
    %v160 = vlaneseq
    %v161 = vand.u32 %v160, 127
    %vm163 = vcmp.lt.s32.totalorder %v161, 8
    %v164 = vsel %vm163, %v159, %v21
    %166 = vst [vmem:[#allocation33] sm:$0xff] %v164
    %v167 = vld [vmem:[#allocation22] sm:$0xff]
    %v168 = vlaneseq
    %v169 = vand.u32 %v168, 127
    %vm171 = vcmp.lt.s32.totalorder %v169, 16
    %v172 = vsel %vm171, %v167, %v22
    %174 = vst [vmem:[#allocation34] sm:$0xff] %v172
    %v175 = vld [vmem:[#allocation32] sm:$0xff]
    %v176 = vld [vmem:[#allocation33] sm:$0xff]
    %v177 = vld [vmem:[#allocation25] sm:$0xff]
    %v178 = vld [vmem:[#allocation25 + $0x8] sm:$0xff]
    %v179 = vld [vmem:[#allocation25 + $0x10] sm:$0xff]
    %v180 = vld [vmem:[#allocation25 + $0x18] sm:$0xff]
    %v181 = vld [vmem:[#allocation25 + $0x20] sm:$0xff]
    %v182 = vld [vmem:[#allocation25 + $0x28] sm:$0xff]
    %v183 = vld [vmem:[#allocation25 + $0x30] sm:$0xff]
    %v184 = vld [vmem:[#allocation25 + $0x38] sm:$0xff]
    %v185 = vld [vmem:[#allocation25 + $0x40] sm:$0xff]
    %v186 = vld [vmem:[#allocation25 + $0x48] sm:$0xff]
    %v187 = vld [vmem:[#allocation25 + $0x50] sm:$0xff]
    %v188 = vld [vmem:[#allocation25 + $0x58] sm:$0xff]
    %v189 = vld [vmem:[#allocation25 + $0x60] sm:$0xff]
    %v190 = vld [vmem:[#allocation25 + $0x68] sm:$0xff]
    %v191 = vld [vmem:[#allocation25 + $0x70] sm:$0xff]
    %v192 = vld [vmem:[#allocation25 + $0x78] sm:$0xff]
    %v193 = vld [vmem:[#allocation25 + $0x80] sm:$0xff]
    %v194 = vld [vmem:[#allocation25 + $0x88] sm:$0xff]
    %v195 = vld [vmem:[#allocation25 + $0x90] sm:$0xff]
    %v196 = vld [vmem:[#allocation25 + $0x98] sm:$0xff]
    %v197 = vld [vmem:[#allocation25 + $0xa0] sm:$0xff]
    %v198 = vld [vmem:[#allocation25 + $0xa8] sm:$0xff]
    %v199 = vld [vmem:[#allocation25 + $0xb0] sm:$0xff]
    %v200 = vld [vmem:[#allocation25 + $0xb8] sm:$0xff]
    %v201 = vld [vmem:[#allocation25 + $0xc0] sm:$0xff]
    %v202 = vld [vmem:[#allocation25 + $0xc8] sm:$0xff]
    %v203 = vld [vmem:[#allocation25 + $0xd0] sm:$0xff]
    %v204 = vld [vmem:[#allocation25 + $0xd8] sm:$0xff]
    %v205 = vld [vmem:[#allocation25 + $0xe0] sm:$0xff]
    %v206 = vld [vmem:[#allocation25 + $0xe8] sm:$0xff]
    %v207 = vld [vmem:[#allocation25 + $0xf0] sm:$0xff]
    %v208 = vld [vmem:[#allocation25 + $0xf8] sm:$0xff]
    %209 = vmatprep.subr.mxu0 %v178
    %210 = vmatpush1.msra.mxu0 %v177
    %211 = vmatprep.subr.mxu0 %v180
    %212 = vmatpush1.msra.mxu0 %v179
    %213 = vmatprep.subr.mxu0 %v182
    %214 = vmatpush1.msra.mxu0 %v181
    %215 = vmatprep.subr.mxu0 %v184
    %216 = vmatpush1.msra.mxu0 %v183
    %217 = vmatprep.subr.mxu0 %v186
    %218 = vmatpush1.msra.mxu0 %v185
    %219 = vmatprep.subr.mxu0 %v188
    %220 = vmatpush1.msra.mxu0 %v187
    %221 = vmatprep.subr.mxu0 %v190
    %222 = vmatpush1.msra.mxu0 %v189
    %223 = vmatprep.subr.mxu0 %v192
    %224 = vmatpush1.msra.mxu0 %v191
    %225 = vmatprep.subr.mxu0 %v194
    %226 = vmatpush1.msra.mxu0 %v193
    %227 = vmatprep.subr.mxu0 %v196
    %228 = vmatpush1.msra.mxu0 %v195
    %229 = vmatprep.subr.mxu0 %v198
    %230 = vmatpush1.msra.mxu0 %v197
    %231 = vmatprep.subr.mxu0 %v200
    %232 = vmatpush1.msra.mxu0 %v199
    %233 = vmatprep.subr.mxu0 %v202
    %234 = vmatpush1.msra.mxu0 %v201
    %235 = vmatprep.subr.mxu0 %v204
    %236 = vmatpush1.msra.mxu0 %v203
    %237 = vmatprep.subr.mxu0 %v206
    %238 = vmatpush1.msra.mxu0 %v205
    %239 = vmatprep.subr.mxu0 %v208
    %240 = vmatpush1.msra.mxu0 %v207
    %241 = vmatprep.subr.mxu0 0.0
    %242 = vmatpush1.msra.mxu0 0.0
    %243 = vmatprep.subr.mxu0 0.0
    %244 = vmatpush1.msra.mxu0 0.0
    %245 = vmatprep.subr.mxu0 0.0
    %246 = vmatpush1.msra.mxu0 0.0
    %247 = vmatprep.subr.mxu0 0.0
    %248 = vmatpush1.msra.mxu0 0.0
    %249 = vmatprep.subr.mxu0 0.0
    %250 = vmatpush1.msra.mxu0 0.0
    %251 = vmatprep.subr.mxu0 0.0
    %252 = vmatpush1.msra.mxu0 0.0
    %253 = vmatprep.subr.mxu0 0.0
    %254 = vmatpush1.msra.mxu0 0.0
    %255 = vmatprep.subr.mxu0 0.0
    %256 = vmatpush1.msra.mxu0 0.0
    %257 = vmatprep.subr.mxu0 0.0
    %258 = vmatpush1.msra.mxu0 0.0
    %259 = vmatprep.subr.mxu0 0.0
    %260 = vmatpush1.msra.mxu0 0.0
    %261 = vmatprep.subr.mxu0 0.0
    %262 = vmatpush1.msra.mxu0 0.0
    %263 = vmatprep.subr.mxu0 0.0
    %264 = vmatpush1.msra.mxu0 0.0
    %265 = vmatprep.subr.mxu0 0.0
    %266 = vmatpush1.msra.mxu0 0.0
    %267 = vmatprep.subr.mxu0 0.0
    %268 = vmatpush1.msra.mxu0 0.0
    %269 = vmatprep.subr.mxu0 0.0
    %270 = vmatpush1.msra.mxu0 0.0
    %271 = vmatprep.subr.mxu0 0.0
    %272 = vmatpush1.msra.mxu0 0.0
    %273 = vmatprep.mubr.f32.mxu0 0.0
    %274 = vmatmul.mubr.f32.gmra.mrb[0].mxu0 %v176
    %v275 = vpop.f32.mrb[0].mxu0
    %v276 = vadd.f32 0.0, %v275
    %v277 = vpop.f32.mrb[0].mxu0
    %v278 = vadd.f32 0.0, %v277
    %279 = vdwg.mxu0
    %v280 = vld [vmem:[#allocation23] sm:$0xff]
    %v281 = vld [vmem:[#allocation23 + $0x8] sm:$0xff]
    %v282 = vld [vmem:[#allocation23 + $0x10] sm:$0xff]
    %v283 = vld [vmem:[#allocation23 + $0x18] sm:$0xff]
    %v284 = vld [vmem:[#allocation23 + $0x20] sm:$0xff]
    %v285 = vld [vmem:[#allocation23 + $0x28] sm:$0xff]
    %v286 = vld [vmem:[#allocation23 + $0x30] sm:$0xff]
    %v287 = vld [vmem:[#allocation23 + $0x38] sm:$0xff]
    %v288 = vld [vmem:[#allocation23 + $0x40] sm:$0xff]
    %v289 = vld [vmem:[#allocation23 + $0x48] sm:$0xff]
    %v290 = vld [vmem:[#allocation23 + $0x50] sm:$0xff]
    %v291 = vld [vmem:[#allocation23 + $0x58] sm:$0xff]
    %v292 = vld [vmem:[#allocation23 + $0x60] sm:$0xff]
    %v293 = vld [vmem:[#allocation23 + $0x68] sm:$0xff]
    %v294 = vld [vmem:[#allocation23 + $0x70] sm:$0xff]
    %v295 = vld [vmem:[#allocation23 + $0x78] sm:$0xff]
    %296 = vmatprep.subr.mxu0 0.0
    %297 = vmatpush1.msra.mxu0 %v280
    %298 = vmatprep.subr.mxu0 0.0
    %299 = vmatpush1.msra.mxu0 %v281
    %300 = vmatprep.subr.mxu0 0.0
    %301 = vmatpush1.msra.mxu0 %v282
    %302 = vmatprep.subr.mxu0 0.0
    %303 = vmatpush1.msra.mxu0 %v283
    %304 = vmatprep.subr.mxu0 0.0
    %305 = vmatpush1.msra.mxu0 %v284
    %306 = vmatprep.subr.mxu0 0.0
    %307 = vmatpush1.msra.mxu0 %v285
    %308 = vmatprep.subr.mxu0 0.0
    %309 = vmatpush1.msra.mxu0 %v286
    %310 = vmatprep.subr.mxu0 0.0
    %311 = vmatpush1.msra.mxu0 %v287
    %312 = vmatprep.subr.mxu0 0.0
    %313 = vmatpush1.msra.mxu0 %v288
    %314 = vmatprep.subr.mxu0 0.0
    %315 = vmatpush1.msra.mxu0 %v289
    %316 = vmatprep.subr.mxu0 0.0
    %317 = vmatpush1.msra.mxu0 %v290
    %318 = vmatprep.subr.mxu0 0.0
    %319 = vmatpush1.msra.mxu0 %v291
    %320 = vmatprep.subr.mxu0 0.0
    %321 = vmatpush1.msra.mxu0 %v292
    %322 = vmatprep.subr.mxu0 0.0
    %323 = vmatpush1.msra.mxu0 %v293
    %324 = vmatprep.subr.mxu0 0.0
    %325 = vmatpush1.msra.mxu0 %v294
    %326 = vmatprep.subr.mxu0 0.0
    %327 = vmatpush1.msra.mxu0 %v295
    %328 = vmatprep.subr.mxu0 0.0
    %329 = vmatpush1.msra.mxu0 0.0
    %330 = vmatprep.subr.mxu0 0.0
    %331 = vmatpush1.msra.mxu0 0.0
    %332 = vmatprep.subr.mxu0 0.0
    %333 = vmatpush1.msra.mxu0 0.0
    %334 = vmatprep.subr.mxu0 0.0
    %335 = vmatpush1.msra.mxu0 0.0
    %336 = vmatprep.subr.mxu0 0.0
    %337 = vmatpush1.msra.mxu0 0.0
    %338 = vmatprep.subr.mxu0 0.0
    %339 = vmatpush1.msra.mxu0 0.0
    %340 = vmatprep.subr.mxu0 0.0
    %341 = vmatpush1.msra.mxu0 0.0
    %342 = vmatprep.subr.mxu0 0.0
    %343 = vmatpush1.msra.mxu0 0.0
    %344 = vmatprep.subr.mxu0 0.0
    %345 = vmatpush1.msra.mxu0 0.0
    %346 = vmatprep.subr.mxu0 0.0
    %347 = vmatpush1.msra.mxu0 0.0
    %348 = vmatprep.subr.mxu0 0.0
    %349 = vmatpush1.msra.mxu0 0.0
    %350 = vmatprep.subr.mxu0 0.0
    %351 = vmatpush1.msra.mxu0 0.0
    %352 = vmatprep.subr.mxu0 0.0
    %353 = vmatpush1.msra.mxu0 0.0
    %354 = vmatprep.subr.mxu0 0.0
    %355 = vmatpush1.msra.mxu0 0.0
    %356 = vmatprep.subr.mxu0 0.0
    %357 = vmatpush1.msra.mxu0 0.0
    %358 = vmatprep.subr.mxu0 0.0
    %359 = vmatpush1.msra.mxu0 0.0
    %360 = vmatprep.mubr.f32.mxu0 0.0
    %361 = vmatmul.mubr.f32.gmra.mrb[0].mxu0 %v175
    %v362 = vpop.f32.mrb[0].mxu0
    %v363 = vadd.f32 %v276, %v362
    %v364 = vpop.f32.mrb[0].mxu0
    %365 = vdwg.mxu0
    %v366 = vld [vmem:[%s2] sm:$0x1]
    %v368 = vlaneseq
    %v369 = vshrl.u32 %v368, 7
    %v370 = vsub.s32 0, %v369
    %v371 = vrot.slane %v366, %v370
    %v373 = vadd.f32 %v363, %v371
    %v374 = vmax.f32 %v373, 0.0
    %v375 = vld [vmem:[#allocation26] sm:$0xff]
    %v376 = vld [vmem:[#allocation26 + $0x8] sm:$0xff]
    %v377 = vld [vmem:[#allocation26 + $0x10] sm:$0xff]
    %v378 = vld [vmem:[#allocation26 + $0x18] sm:$0xff]
    %v379 = vld [vmem:[#allocation26 + $0x20] sm:$0xff]
    %v380 = vld [vmem:[#allocation26 + $0x28] sm:$0xff]
    %v381 = vld [vmem:[#allocation26 + $0x30] sm:$0xff]
    %v382 = vld [vmem:[#allocation26 + $0x38] sm:$0xff]
    %v383 = vld [vmem:[#allocation26 + $0x40] sm:$0xff]
    %v384 = vld [vmem:[#allocation26 + $0x48] sm:$0xff]
    %v385 = vld [vmem:[#allocation26 + $0x50] sm:$0xff]
    %v386 = vld [vmem:[#allocation26 + $0x58] sm:$0xff]
    %v387 = vld [vmem:[#allocation26 + $0x60] sm:$0xff]
    %v388 = vld [vmem:[#allocation26 + $0x68] sm:$0xff]
    %v389 = vld [vmem:[#allocation26 + $0x70] sm:$0xff]
    %v390 = vld [vmem:[#allocation26 + $0x78] sm:$0xff]
    %v391 = vld [vmem:[#allocation26 + $0x80] sm:$0xff]
    %v392 = vld [vmem:[#allocation26 + $0x88] sm:$0xff]
    %v393 = vld [vmem:[#allocation26 + $0x90] sm:$0xff]
    %v394 = vld [vmem:[#allocation26 + $0x98] sm:$0xff]
    %v395 = vld [vmem:[#allocation26 + $0xa0] sm:$0xff]
    %v396 = vld [vmem:[#allocation26 + $0xa8] sm:$0xff]
    %v397 = vld [vmem:[#allocation26 + $0xb0] sm:$0xff]
    %v398 = vld [vmem:[#allocation26 + $0xb8] sm:$0xff]
    %v399 = vld [vmem:[#allocation26 + $0xc0] sm:$0xff]
    %v400 = vld [vmem:[#allocation26 + $0xc8] sm:$0xff]
    %v401 = vld [vmem:[#allocation26 + $0xd0] sm:$0xff]
    %v402 = vld [vmem:[#allocation26 + $0xd8] sm:$0xff]
    %v403 = vld [vmem:[#allocation26 + $0xe0] sm:$0xff]
    %v404 = vld [vmem:[#allocation26 + $0xe8] sm:$0xff]
    %v405 = vld [vmem:[#allocation26 + $0xf0] sm:$0xff]
    %v406 = vld [vmem:[#allocation26 + $0xf8] sm:$0xff]
    %v407 = vld [vmem:[%s4] sm:$0x3]
    %v409 = vlaneseq
    %v410 = vshrl.u32 %v409, 7
    %v411 = vsub.s32 0, %v410
    %v412 = vrot.slane %v407, %v411
    %v413 = vlaneseq
    %v414 = vshrl.u32 %v413, 7
    %v415 = vsub.s32 1, %v414
    %v416 = vrot.slane %v407, %v415
    %419 = vmatprep.subr.mxu0 %v376
    %420 = vmatpush1.msra.mxu0 %v375
    %421 = vmatprep.subr.mxu0 %v378
    %422 = vmatpush1.msra.mxu0 %v377
    %423 = vmatprep.subr.mxu0 %v380
    %424 = vmatpush1.msra.mxu0 %v379
    %425 = vmatprep.subr.mxu0 %v382
    %426 = vmatpush1.msra.mxu0 %v381
    %427 = vmatprep.subr.mxu0 %v384
    %428 = vmatpush1.msra.mxu0 %v383
    %429 = vmatprep.subr.mxu0 %v386
    %430 = vmatpush1.msra.mxu0 %v385
    %431 = vmatprep.subr.mxu0 %v388
    %432 = vmatpush1.msra.mxu0 %v387
    %433 = vmatprep.subr.mxu0 %v390
    %434 = vmatpush1.msra.mxu0 %v389
    %435 = vmatprep.subr.mxu0 %v392
    %436 = vmatpush1.msra.mxu0 %v391
    %437 = vmatprep.subr.mxu0 %v394
    %438 = vmatpush1.msra.mxu0 %v393
    %439 = vmatprep.subr.mxu0 %v396
    %440 = vmatpush1.msra.mxu0 %v395
    %441 = vmatprep.subr.mxu0 %v398
    %442 = vmatpush1.msra.mxu0 %v397
    %443 = vmatprep.subr.mxu0 %v400
    %444 = vmatpush1.msra.mxu0 %v399
    %445 = vmatprep.subr.mxu0 %v402
    %446 = vmatpush1.msra.mxu0 %v401
    %447 = vmatprep.subr.mxu0 %v404
    %448 = vmatpush1.msra.mxu0 %v403
    %449 = vmatprep.subr.mxu0 %v406
    %450 = vmatpush1.msra.mxu0 %v405
    %451 = vmatprep.subr.mxu0 0.0
    %452 = vmatpush1.msra.mxu0 0.0
    %453 = vmatprep.subr.mxu0 0.0
    %454 = vmatpush1.msra.mxu0 0.0
    %455 = vmatprep.subr.mxu0 0.0
    %456 = vmatpush1.msra.mxu0 0.0
    %457 = vmatprep.subr.mxu0 0.0
    %458 = vmatpush1.msra.mxu0 0.0
    %459 = vmatprep.subr.mxu0 0.0
    %460 = vmatpush1.msra.mxu0 0.0
    %461 = vmatprep.subr.mxu0 0.0
    %462 = vmatpush1.msra.mxu0 0.0
    %463 = vmatprep.subr.mxu0 0.0
    %464 = vmatpush1.msra.mxu0 0.0
    %465 = vmatprep.subr.mxu0 0.0
    %466 = vmatpush1.msra.mxu0 0.0
    %467 = vmatprep.subr.mxu0 0.0
    %468 = vmatpush1.msra.mxu0 0.0
    %469 = vmatprep.subr.mxu0 0.0
    %470 = vmatpush1.msra.mxu0 0.0
    %471 = vmatprep.subr.mxu0 0.0
    %472 = vmatpush1.msra.mxu0 0.0
    %473 = vmatprep.subr.mxu0 0.0
    %474 = vmatpush1.msra.mxu0 0.0
    %475 = vmatprep.subr.mxu0 0.0
    %476 = vmatpush1.msra.mxu0 0.0
    %477 = vmatprep.subr.mxu0 0.0
    %478 = vmatpush1.msra.mxu0 0.0
    %479 = vmatprep.subr.mxu0 0.0
    %480 = vmatpush1.msra.mxu0 0.0
    %481 = vmatprep.subr.mxu0 0.0
    %482 = vmatpush1.msra.mxu0 0.0
    %483 = vmatprep.mubr.f32.mxu0 0.0
    %484 = vmatmul.mubr.f32.gmra.mrb[0].mxu0 %v374
    %v485 = vpop.f32.mrb[0].mxu0
    %v486 = vadd.f32 %v412, %v485
    %v487 = vpop.f32.mrb[0].mxu0
    %v488 = vadd.f32 %v416, %v487
    %489 = vdwg.mxu0
    %v490 = vmul.f32 %v488, 0.5
    %v491 = vmul.f32 %v490, 1.442695
    %v492 = vpow.pop %v491
    %v493 = vld [vmem:[#allocation34] sm:$0xff]
    %v494 = vmul.f32 %v493, %v492
    %v495 = vadd.f32 %v494, %v486
    %v496 = vld [vmem:[#allocation28] sm:$0xff]
    %v497 = vld [vmem:[#allocation28 + $0x8] sm:$0xff]
    %v498 = vld [vmem:[#allocation28 + $0x10] sm:$0xff]
    %v499 = vld [vmem:[#allocation28 + $0x18] sm:$0xff]
    %v500 = vld [vmem:[#allocation28 + $0x20] sm:$0xff]
    %v501 = vld [vmem:[#allocation28 + $0x28] sm:$0xff]
    %v502 = vld [vmem:[#allocation28 + $0x30] sm:$0xff]
    %v503 = vld [vmem:[#allocation28 + $0x38] sm:$0xff]
    %v504 = vld [vmem:[#allocation28 + $0x40] sm:$0xff]
    %v505 = vld [vmem:[#allocation28 + $0x48] sm:$0xff]
    %v506 = vld [vmem:[#allocation28 + $0x50] sm:$0xff]
    %v507 = vld [vmem:[#allocation28 + $0x58] sm:$0xff]
    %v508 = vld [vmem:[#allocation28 + $0x60] sm:$0xff]
    %v509 = vld [vmem:[#allocation28 + $0x68] sm:$0xff]
    %v510 = vld [vmem:[#allocation28 + $0x70] sm:$0xff]
    %v511 = vld [vmem:[#allocation28 + $0x78] sm:$0xff]
    %512 = vmatprep.subr.mxu0 0.0
    %513 = vmatpush1.msra.mxu0 %v496
    %514 = vmatprep.subr.mxu0 0.0
    %515 = vmatpush1.msra.mxu0 %v497
    %516 = vmatprep.subr.mxu0 0.0
    %517 = vmatpush1.msra.mxu0 %v498
    %518 = vmatprep.subr.mxu0 0.0
    %519 = vmatpush1.msra.mxu0 %v499
    %520 = vmatprep.subr.mxu0 0.0
    %521 = vmatpush1.msra.mxu0 %v500
    %522 = vmatprep.subr.mxu0 0.0
    %523 = vmatpush1.msra.mxu0 %v501
    %524 = vmatprep.subr.mxu0 0.0
    %525 = vmatpush1.msra.mxu0 %v502
    %526 = vmatprep.subr.mxu0 0.0
    %527 = vmatpush1.msra.mxu0 %v503
    %528 = vmatprep.subr.mxu0 0.0
    %529 = vmatpush1.msra.mxu0 %v504
    %530 = vmatprep.subr.mxu0 0.0
    %531 = vmatpush1.msra.mxu0 %v505
    %532 = vmatprep.subr.mxu0 0.0
    %533 = vmatpush1.msra.mxu0 %v506
    %534 = vmatprep.subr.mxu0 0.0
    %535 = vmatpush1.msra.mxu0 %v507
    %536 = vmatprep.subr.mxu0 0.0
    %537 = vmatpush1.msra.mxu0 %v508
    %538 = vmatprep.subr.mxu0 0.0
    %539 = vmatpush1.msra.mxu0 %v509
    %540 = vmatprep.subr.mxu0 0.0
    %541 = vmatpush1.msra.mxu0 %v510
    %542 = vmatprep.subr.mxu0 0.0
    %543 = vmatpush1.msra.mxu0 %v511
    %544 = vmatprep.subr.mxu0 0.0
    %545 = vmatpush1.msra.mxu0 0.0
    %546 = vmatprep.subr.mxu0 0.0
    %547 = vmatpush1.msra.mxu0 0.0
    %548 = vmatprep.subr.mxu0 0.0
    %549 = vmatpush1.msra.mxu0 0.0
    %550 = vmatprep.subr.mxu0 0.0
    %551 = vmatpush1.msra.mxu0 0.0
    %552 = vmatprep.subr.mxu0 0.0
    %553 = vmatpush1.msra.mxu0 0.0
    %554 = vmatprep.subr.mxu0 0.0
    %555 = vmatpush1.msra.mxu0 0.0
    %556 = vmatprep.subr.mxu0 0.0
    %557 = vmatpush1.msra.mxu0 0.0
    %558 = vmatprep.subr.mxu0 0.0
    %559 = vmatpush1.msra.mxu0 0.0
    %560 = vmatprep.subr.mxu0 0.0
    %561 = vmatpush1.msra.mxu0 0.0
    %562 = vmatprep.subr.mxu0 0.0
    %563 = vmatpush1.msra.mxu0 0.0
    %564 = vmatprep.subr.mxu0 0.0
    %565 = vmatpush1.msra.mxu0 0.0
    %566 = vmatprep.subr.mxu0 0.0
    %567 = vmatpush1.msra.mxu0 0.0
    %568 = vmatprep.subr.mxu0 0.0
    %569 = vmatpush1.msra.mxu0 0.0
    %570 = vmatprep.subr.mxu0 0.0
    %571 = vmatpush1.msra.mxu0 0.0
    %572 = vmatprep.subr.mxu0 0.0
    %573 = vmatpush1.msra.mxu0 0.0
    %574 = vmatprep.subr.mxu0 0.0
    %575 = vmatpush1.msra.mxu0 0.0
    %576 = vmatprep.mubr.f32.mxu0 0.0
    %577 = vmatmul.mubr.f32.gmra.mrb[0].mxu0 %v495
    %v578 = vpop.f32.mrb[0].mxu0
    %v579 = vadd.f32 %v278, %v578
    %v580 = vpop.f32.mrb[0].mxu0
    %581 = vdwg.mxu0
    %v582 = vld [vmem:[%s6] sm:$0x1]
    %v584 = vlaneseq
    %v585 = vshrl.u32 %v584, 7
    %v586 = vsub.s32 0, %v585
    %v587 = vrot.slane %v582, %v586
    %v589 = vadd.f32 %v579, %v587
    %v590 = vmax.f32 %v589, 0.0
    %v591 = vld [vmem:[#allocation29] sm:$0xff]
    %v592 = vld [vmem:[#allocation29 + $0x8] sm:$0xff]
    %v593 = vld [vmem:[#allocation29 + $0x10] sm:$0xff]
    %v594 = vld [vmem:[#allocation29 + $0x18] sm:$0xff]
    %v595 = vld [vmem:[#allocation29 + $0x20] sm:$0xff]
    %v596 = vld [vmem:[#allocation29 + $0x28] sm:$0xff]
    %v597 = vld [vmem:[#allocation29 + $0x30] sm:$0xff]
    %v598 = vld [vmem:[#allocation29 + $0x38] sm:$0xff]
    %v599 = vld [vmem:[#allocation29 + $0x40] sm:$0xff]
    %v600 = vld [vmem:[#allocation29 + $0x48] sm:$0xff]
    %v601 = vld [vmem:[#allocation29 + $0x50] sm:$0xff]
    %v602 = vld [vmem:[#allocation29 + $0x58] sm:$0xff]
    %v603 = vld [vmem:[#allocation29 + $0x60] sm:$0xff]
    %v604 = vld [vmem:[#allocation29 + $0x68] sm:$0xff]
    %v605 = vld [vmem:[#allocation29 + $0x70] sm:$0xff]
    %v606 = vld [vmem:[#allocation29 + $0x78] sm:$0xff]
    %v607 = vld [vmem:[%s8] sm:$0x1]
    %v609 = vlaneseq
    %v610 = vshrl.u32 %v609, 7
    %v611 = vsub.s32 0, %v610
    %v612 = vrot.slane %v607, %v611
    %614 = vmatprep.subr.mxu0 0.0
    %615 = vmatpush1.msra.mxu0 %v591
    %616 = vmatprep.subr.mxu0 0.0
    %617 = vmatpush1.msra.mxu0 %v592
    %618 = vmatprep.subr.mxu0 0.0
    %619 = vmatpush1.msra.mxu0 %v593
    %620 = vmatprep.subr.mxu0 0.0
    %621 = vmatpush1.msra.mxu0 %v594
    %622 = vmatprep.subr.mxu0 0.0
    %623 = vmatpush1.msra.mxu0 %v595
    %624 = vmatprep.subr.mxu0 0.0
    %625 = vmatpush1.msra.mxu0 %v596
    %626 = vmatprep.subr.mxu0 0.0
    %627 = vmatpush1.msra.mxu0 %v597
    %628 = vmatprep.subr.mxu0 0.0
    %629 = vmatpush1.msra.mxu0 %v598
    %630 = vmatprep.subr.mxu0 0.0
    %631 = vmatpush1.msra.mxu0 %v599
    %632 = vmatprep.subr.mxu0 0.0
    %633 = vmatpush1.msra.mxu0 %v600
    %634 = vmatprep.subr.mxu0 0.0
    %635 = vmatpush1.msra.mxu0 %v601
    %636 = vmatprep.subr.mxu0 0.0
    %637 = vmatpush1.msra.mxu0 %v602
    %638 = vmatprep.subr.mxu0 0.0
    %639 = vmatpush1.msra.mxu0 %v603
    %640 = vmatprep.subr.mxu0 0.0
    %641 = vmatpush1.msra.mxu0 %v604
    %642 = vmatprep.subr.mxu0 0.0
    %643 = vmatpush1.msra.mxu0 %v605
    %644 = vmatprep.subr.mxu0 0.0
    %645 = vmatpush1.msra.mxu0 %v606
    %646 = vmatprep.subr.mxu0 0.0
    %647 = vmatpush1.msra.mxu0 0.0
    %648 = vmatprep.subr.mxu0 0.0
    %649 = vmatpush1.msra.mxu0 0.0
    %650 = vmatprep.subr.mxu0 0.0
    %651 = vmatpush1.msra.mxu0 0.0
    %652 = vmatprep.subr.mxu0 0.0
    %653 = vmatpush1.msra.mxu0 0.0
    %654 = vmatprep.subr.mxu0 0.0
    %655 = vmatpush1.msra.mxu0 0.0
    %656 = vmatprep.subr.mxu0 0.0
    %657 = vmatpush1.msra.mxu0 0.0
    %658 = vmatprep.subr.mxu0 0.0
    %659 = vmatpush1.msra.mxu0 0.0
    %660 = vmatprep.subr.mxu0 0.0
    %661 = vmatpush1.msra.mxu0 0.0
    %662 = vmatprep.subr.mxu0 0.0
    %663 = vmatpush1.msra.mxu0 0.0
    %664 = vmatprep.subr.mxu0 0.0
    %665 = vmatpush1.msra.mxu0 0.0
    %666 = vmatprep.subr.mxu0 0.0
    %667 = vmatpush1.msra.mxu0 0.0
    %668 = vmatprep.subr.mxu0 0.0
    %669 = vmatpush1.msra.mxu0 0.0
    %670 = vmatprep.subr.mxu0 0.0
    %671 = vmatpush1.msra.mxu0 0.0
    %672 = vmatprep.subr.mxu0 0.0
    %673 = vmatpush1.msra.mxu0 0.0
    %674 = vmatprep.subr.mxu0 0.0
    %675 = vmatpush1.msra.mxu0 0.0
    %676 = vmatprep.subr.mxu0 0.0
    %677 = vmatpush1.msra.mxu0 0.0
    %678 = vmatprep.mubr.f32.mxu0 0.0
    %679 = vmatmul.mubr.f32.gmra.mrb[0].mxu0 %v590
    %v680 = vpop.f32.mrb[0].mxu0
    %v681 = vadd.f32 %v612, %v680
    %v682 = vpop.f32.mrb[0].mxu0
    %683 = vdwg.mxu0
    %684 = vst [vmem:[#allocation31] sm:$0xff] %v681
    %685 = vst [vmem:[%s14] sm:$0xff] %v486
    %686 = vst [vmem:[%s14 + $0x8] sm:$0xff] %v488
    // Predicated region
    $region82: #{cvae_forward.2} parent=1 // pred_check
      _
    $region83: #{cvae_forward.2} parent=1 // pred_check_branch
      %688 = sbr.rel (0) target = $region85
    $region84: #{cvae_forward.2} parent=1 // pred_region
      %s690 = ssub.s32 128, 128
      %691 = vsyncadd [#allocation19], %s690
      %s693 = sshll.u32 [#allocation31], 4
      %s694 = int_to_ptr.vmem [resolvable:$true] %s693
      %696 = dma.vmem_to_hbm [thread:$0]  %s694, 128, %s13, [#allocation19]
    $region85: #{cvae_forward.2} parent=1 // pred_fallthru
      _
    // Predicated region
    $region86: #{cvae_forward.2} parent=1 // pred_check
      _
    $region87: #{cvae_forward.2} parent=1 // pred_check_branch
      %698 = sbr.rel (0) target = $region89
    $region88: #{cvae_forward.2} parent=1 // pred_region
      _
    $region89: #{cvae_forward.2} parent=1 // pred_fallthru
      _
    // Predicated region
    $region90: #{cvae_forward.2} parent=1 // pred_check
      _
    $region91: #{cvae_forward.2} parent=1 // pred_check_branch
      %700 = sbr.rel (0) target = $region93
    $region92: #{cvae_forward.2} parent=1 // pred_region
      %701 = dma.done [#allocation19], 128
    $region93: #{cvae_forward.2} parent=1 // pred_fallthru
      _
    // Predicated region
    $region94: #{cvae_forward.2} parent=1 // pred_check
      _
    $region95: #{cvae_forward.2} parent=1 // pred_check_branch
      %703 = sbr.rel (0) target = $region97
    $region96: #{cvae_forward.2} parent=1 // pred_region
      _
    $region97: #{cvae_forward.2} parent=1 // pred_fallthru
      _
    %704 = vsyncpa [#allocation18], 1
    %705 = vsyncpa [#allocation21], 1
    %706 = vsyncpa [#allocation24], 1
    %707 = vsyncpa [#allocation27], 1
    %708 = vsyncpa [#allocation30], 1
    %709 = vsyncpa [#allocation19], 1

</llo_original>
